<compile_context>
chip_gen: v6e
topology: v6e:2x2x1
jax: 0.10.0
libtpu: 0.0.40
codegen_flags: <defaults>
</compile_context>

<pallas_src>
import jax
import jax.numpy as jnp
from jax.experimental import pallas as pl
from jax.experimental.pallas import tpu as pltpu


def _round_up(x: int, m: int) -> int:
    return ((x + m - 1) // m) * m


def _fused_mlp_kernel(x_ref, w_ref, b_ref, o_ref, h_ref):
    """One grid step = one Linear(+ReLU) layer applied to one batch tile.

    x_ref: (TB, P)        padded input tile in compute dtype (read at layer 0)
    w_ref: (1, P, P)      padded weights of the current layer (compute dtype)
    b_ref: (1, 1, P) f32  padded bias of the current layer
    o_ref: (TB, P)        padded output tile (written at the last layer only)
    h_ref: (TB, P) f32    VMEM-resident activation (persists across layers)
    """
    layer = pl.program_id(1)
    last = pl.num_programs(1) - 1

    @pl.when(layer == 0)
    def _():
        h_ref[...] = x_ref[...].astype(jnp.float32)

    # MXU matmul in compute dtype, f32 accumulation.
    y = jnp.dot(
        h_ref[...].astype(w_ref.dtype),
        w_ref[0],
        preferred_element_type=jnp.float32,
    )
    y = y + b_ref[0]                      # bias add + ReLU stay in f32 (VPU)

    @pl.when(layer < last)
    def _():
        h_ref[...] = jnp.maximum(y, 0.0)  # hidden layers: ReLU, keep resident

    @pl.when(layer == last)
    def _():
        o_ref[...] = y.astype(o_ref.dtype)  # final Linear has no ReLU


def deep_translation_net_forward(params, x, *, block_b=256,
                                 compute_dtype=jnp.bfloat16):
    """Forward pass of DeepTranslationNet as a single fused Pallas kernel.

    params: list of (w, b) with w: (fan_in, fan_out), b: (fan_out,)
            (w is the transpose of the PyTorch nn.Linear weight, so y = x@w+b).
    x:      (batch, D) input.
    Returns (batch, D) translation factors.
    """
    B, D = x.shape
    L = len(params)
    widths = [w.shape[0] for w, _ in params] + [params[-1][0].shape[1]]
    assert widths[0] == D and widths[-1] == D

    # Common lane-dense padded feature width.
    P = _round_up(max(widths), 128)

    # TODO(synk): if one padded layer (P*P in compute dtype) is too large to
    # double-buffer in VMEM (e.g. num_hidden >~ 4096 on v7x's 64 MiB), the
    # weight's N/K dims would additionally need tiling; not implemented here.

    # Zero-pad every layer to (P, P)/(P,) and stack into one streamed array.
    w_stack = jnp.stack([
        jnp.pad(w.astype(jnp.float32),
                ((0, P - w.shape[0]), (0, P - w.shape[1]))).astype(compute_dtype)
        for w, _ in params
    ])                                               # (L, P, P) compute dtype
    b_stack = jnp.stack([
        jnp.pad(b.astype(jnp.float32), (0, P - b.shape[0])).reshape(1, P)
        for _, b in params
    ])                                               # (L, 1, P) f32

    # Batch tiling: multiples of 8 sublanes, default tile of 256 rows.
    TB = _round_up(min(int(block_b), _round_up(B, 8)), 8)
    Bp = _round_up(B, TB)
    nb = Bp // TB

    # Input padded + stored in compute dtype (halves the x DMA for bf16).
    x_pad = jnp.pad(x.astype(jnp.float32),
                    ((0, Bp - B), (0, P - D))).astype(compute_dtype)

    # VMEM budget: double-buffered weights/bias/x/out + activation scratch.
    w_isz = w_stack.dtype.itemsize
    x_isz = x_pad.dtype.itemsize
    o_isz = jnp.dtype(x.dtype).itemsize
    vmem_bytes = (2 * P * P * w_isz        # weight double buffer
                  + 2 * P * 4              # bias double buffer
                  + 2 * TB * P * x_isz     # x double buffer
                  + 2 * TB * P * o_isz     # out double buffer
                  + TB * P * 4)            # activation scratch
    vmem_limit = int(min(max(vmem_bytes + (4 << 20), 32 << 20), 100 << 20))

    cost = pl.CostEstimate(
        flops=2 * Bp * P * P * L,
        transcendentals=0,
        bytes_accessed=int(w_stack.size * w_isz + b_stack.size * 4
                           + x_pad.size * x_isz + Bp * P * o_isz),
    )

    out_pad = pl.pallas_call(
        _fused_mlp_kernel,
        out_shape=jax.ShapeDtypeStruct((Bp, P), x.dtype),
        grid_spec=pltpu.PrefetchScalarGridSpec(
            num_scalar_prefetch=0,
            grid=(nb, L),                                       # (batch, layer)
            in_specs=[
                pl.BlockSpec((TB, P), lambda i, l: (i, 0)),       # x tile
                pl.BlockSpec((1, P, P), lambda i, l: (l, 0, 0)),  # layer weight
                pl.BlockSpec((1, 1, P), lambda i, l: (l, 0, 0)),  # layer bias
            ],
            out_specs=pl.BlockSpec((TB, P), lambda i, l: (i, 0)),
            scratch_shapes=[pltpu.VMEM((TB, P), jnp.float32)],
        ),
        compiler_params=pltpu.CompilerParams(
            dimension_semantics=("parallel", "arbitrary"),
            vmem_limit_bytes=vmem_limit,
        ),
        cost_estimate=cost,
    )(x_pad, w_stack, b_stack)

    return out_pad[:B, :D]


def init_deep_translation_net(key, D, num_hidden, num_layers, dtype=jnp.float32):
    """Mirrors the module's layer structure with PyTorch-default Linear init:
    Linear(D,H) -> ReLU -> [Linear(H,H) -> ReLU]*(num_layers-2) -> Linear(H,D).
    Weights are stored as (in_features, out_features) so y = x @ W + b."""
    dims = [D] + [num_hidden] * (num_layers - 1) + [D]
    params = []
    for fan_in, fan_out in zip(dims[:-1], dims[1:]):
        key, kw, kb = jax.random.split(key, 3)
        bound = 1.0 / float(fan_in) ** 0.5
        w = jax.random.uniform(kw, (fan_in, fan_out), dtype, -bound, bound)
        b = jax.random.uniform(kb, (fan_out,), dtype, -bound, bound)
        params.append((w, b))
    return params


def _reference_forward(params, x, compute_dtype=jnp.float32):
    """Pure-JAX reference with the same math as the kernel path."""
    h = x.astype(jnp.float32)
    n = len(params)
    for i, (w, b) in enumerate(params):
        h = jnp.dot(h.astype(compute_dtype), w.astype(compute_dtype),
                    preferred_element_type=jnp.float32) + b.astype(jnp.float32)
        if i < n - 1:
            h = jnp.maximum(h, 0.0)
    return h.astype(x.dtype)


if __name__ == "__main__":
    # Small shapes consistent with forward(x: (batch_size, D)).
    B, D, H, L = 2, 4, 32, 3

    key = jax.random.PRNGKey(0)
    key_x, key_p, key_x2, key_p2 = jax.random.split(key, 4)
    x = jax.random.normal(key_x, (B, D), dtype=jnp.float32)
    params = init_deep_translation_net(key_p, D, H, L)

    # 1) f32 compute path vs f32 reference (tolerance covers matmul-precision
    #    differences between XLA's default f32 dot and the MXU path).
    out_f32 = jax.block_until_ready(
        deep_translation_net_forward(params, x, compute_dtype=jnp.float32))
    ref_f32 = _reference_forward(params, x, compute_dtype=jnp.float32)
    assert out_f32.shape == (B, D)
    assert jnp.allclose(out_f32, ref_f32, atol=1e-2, rtol=1e-2)

    # 2) Default bf16-weight path vs a matching bf16-cast reference.
    out_bf16 = jax.block_until_ready(deep_translation_net_forward(params, x))
    ref_bf16 = _reference_forward(params, x, compute_dtype=jnp.bfloat16)
    assert out_bf16.shape == (B, D)
    assert jnp.allclose(out_bf16, ref_bf16, atol=1e-2, rtol=1e-2)

    # 3) Multi-batch-tile path (3 batch tiles x 4 layers), still small.
    B2, D2, H2, L2 = 20, 4, 64, 4
    x2 = jax.random.normal(key_x2, (B2, D2), dtype=jnp.float32)
    params2 = init_deep_translation_net(key_p2, D2, H2, L2)
    out2 = jax.block_until_ready(
        deep_translation_net_forward(params2, x2, block_b=8,
                                     compute_dtype=jnp.float32))
    ref2 = _reference_forward(params2, x2, compute_dtype=jnp.float32)
    assert out2.shape == (B2, D2)
    assert jnp.allclose(out2, ref2, atol=1e-2, rtol=1e-2)

    print("KERNEL_OK")
</pallas_src>

<mosaic_0001>
module attributes {stable_mosaic.version = 11 : i64} {
  func.func @_fused_mlp_kernel(%arg0: i32, %arg1: i32, %arg2: memref<8x128xf32, #tpu.memory_space<vmem>>, %arg3: memref<1x128x128xf32, #tpu.memory_space<vmem>>, %arg4: memref<1x1x128xf32, #tpu.memory_space<vmem>>, %arg5: memref<8x128xf32, #tpu.memory_space<vmem>>, %arg6: memref<8x128xf32, #tpu.memory_space<vmem>>) attributes {dimension_semantics = [#tpu.dimension_semantics<parallel>, #tpu.dimension_semantics<arbitrary>], iteration_bounds = array<i64: 1, 3>, scalar_prefetch = 0 : i64, scratch_operands = 1 : i64, tpu.core_type = #tpu.core_type<tc>, window_params = [{transform_indices = @transform_0, window_bounds = array<i64: 8, 128>}, {transform_indices = @transform_1, window_bounds = array<i64: 1, 128, 128>}, {transform_indices = @transform_2, window_bounds = array<i64: 1, 1, 128>}, {transform_indices = @transform_3, window_bounds = array<i64: 8, 128>}]} {
    %c0_i32 = arith.constant 0 : i32
    %0 = arith.cmpi eq, %arg1, %c0_i32 : i32
    %1 = arith.extui %0 : i1 to i32
    %c0_i32_0 = arith.constant 0 : i32
    %2 = arith.cmpi ne, %1, %c0_i32_0 : i32
    scf.if %2 {
      %c0_11 = arith.constant 0 : index
      %c0_12 = arith.constant 0 : index
      %17 = vector.load %arg2[%c0_11, %c0_12] : memref<8x128xf32, #tpu.memory_space<vmem>>, vector<8x128xf32>
      %c0_13 = arith.constant 0 : index
      %c0_14 = arith.constant 0 : index
      %18 = vector.load %arg6[%c0_13, %c0_14] : memref<8x128xf32, #tpu.memory_space<vmem>>, vector<8x128xf32>
      tpu.vector_store %arg6[%c0_13, %c0_14], %17 {strides = array<i32>} : memref<8x128xf32, #tpu.memory_space<vmem>>, vector<8x128xf32>,
    } else {
    }
    %c0 = arith.constant 0 : index
    %c0_1 = arith.constant 0 : index
    %3 = vector.load %arg6[%c0, %c0_1] : memref<8x128xf32, #tpu.memory_space<vmem>>, vector<8x128xf32>
    %c0_2 = arith.constant 0 : index
    %c0_3 = arith.constant 0 : index
    %c0_4 = arith.constant 0 : index
    %4 = vector.load %arg3[%c0_2, %c0_3, %c0_4] : memref<1x128x128xf32, #tpu.memory_space<vmem>>, vector<1x128x128xf32>
    %5 = vector.shape_cast %4 : vector<1x128x128xf32> to vector<128x128xf32>
    %cst = arith.constant dense<0.000000e+00> : vector<8x128xf32>
    %6 = tpu.matmul %3, %5, %cst {dimension_numbers = #tpu.dot_dimension_numbers<[1], [0], [0], [1], [0, 0, 1, 1], [], []>} : vector<8x128xf32>, vector<128x128xf32>, vector<8x128xf32> -> vector<8x128xf32>
    %c0_5 = arith.constant 0 : index
    %c0_6 = arith.constant 0 : index
    %c0_7 = arith.constant 0 : index
    %7 = vector.load %arg4[%c0_5, %c0_6, %c0_7] : memref<1x1x128xf32, #tpu.memory_space<vmem>>, vector<1x1x128xf32>
    %8 = vector.shape_cast %7 : vector<1x1x128xf32> to vector<1x128xf32>
    %9 = vector.broadcast %8 : vector<1x128xf32> to vector<8x128xf32>
    %10 = arith.addf %6, %9 : vector<8x128xf32>
    %c2_i32 = arith.constant 2 : i32
    %11 = arith.cmpi slt, %arg1, %c2_i32 : i32
    %12 = arith.extui %11 : i1 to i32
    %c0_i32_8 = arith.constant 0 : i32
    %13 = arith.cmpi ne, %12, %c0_i32_8 : i32
    scf.if %13 {
      %cst_11 = arith.constant 0.000000e+00 : f32
      %17 = vector.broadcast %cst_11 : f32 to vector<8x128xf32>
      %18 = arith.maximumf %10, %17 : vector<8x128xf32>
      %c0_12 = arith.constant 0 : index
      %c0_13 = arith.constant 0 : index
      %19 = vector.load %arg6[%c0_12, %c0_13] : memref<8x128xf32, #tpu.memory_space<vmem>>, vector<8x128xf32>
      tpu.vector_store %arg6[%c0_12, %c0_13], %18 {strides = array<i32>} : memref<8x128xf32, #tpu.memory_space<vmem>>, vector<8x128xf32>,
    } else {
    }
    %c2_i32_9 = arith.constant 2 : i32
    %14 = arith.cmpi eq, %arg1, %c2_i32_9 : i32
    %15 = arith.extui %14 : i1 to i32
    %c0_i32_10 = arith.constant 0 : i32
    %16 = arith.cmpi ne, %15, %c0_i32_10 : i32
    scf.if %16 {
      %c0_11 = arith.constant 0 : index
      %c0_12 = arith.constant 0 : index
      %17 = vector.load %arg5[%c0_11, %c0_12] : memref<8x128xf32, #tpu.memory_space<vmem>>, vector<8x128xf32>
      tpu.vector_store %arg5[%c0_11, %c0_12], %10 {strides = array<i32>} : memref<8x128xf32, #tpu.memory_space<vmem>>, vector<8x128xf32>,
    } else {
    }
    return
  }
  func.func @transform_0(%arg0: i32, %arg1: i32) -> (i32, i32) {
    %c0_i32 = arith.constant 0 : i32
    %c0_i32_0 = arith.constant 0 : i32
    return %arg0, %c0_i32 : i32, i32
  }
  func.func @transform_1(%arg0: i32, %arg1: i32) -> (i32, i32, i32) {
    %c0_i32 = arith.constant 0 : i32
    %c0_i32_0 = arith.constant 0 : i32
    %c0_i32_1 = arith.constant 0 : i32
    return %arg1, %c0_i32, %c0_i32_0 : i32, i32, i32
  }
  func.func @transform_2(%arg0: i32, %arg1: i32) -> (i32, i32, i32) {
    %c0_i32 = arith.constant 0 : i32
    %c0_i32_0 = arith.constant 0 : i32
    %c0_i32_1 = arith.constant 0 : i32
    return %arg1, %c0_i32, %c0_i32_0 : i32, i32, i32
  }
  func.func @transform_3(%arg0: i32, %arg1: i32) -> (i32, i32) {
    %c0_i32 = arith.constant 0 : i32
    %c0_i32_0 = arith.constant 0 : i32
    return %arg0, %c0_i32 : i32, i32
  }
}

</mosaic_0001>

<llo_original>
// kernel: tpu_custom_call.1
$region0: #{tpu_custom_call.1}
  #allocation0 [shape = 'u32[]', space=smem, size = 0x4, offset = 0x4, fixed_abs, tag = 'smem constant byte address 0x4 - core index']
  #allocation1 [shape = 'u32[144,128]{1,0:T(1,128)}', space=vmem, size = 0x12000, scoped, tag = 'internal scratch']
  #allocation2 [shape = 'f32[8,128]{1,0:T(8,128)}', space=vmem, size = 0x1000, scoped, tag = 'scratch operand']
  %s0 = inlined_call_operand.hbm [shape: f32[8,128], index: 0, kind: input, shape index: {}]
  %s1 = inlined_call_operand.hbm [shape: f32[3,128,128], index: 1, kind: input, shape index: {}]
  %s2 = inlined_call_operand.vmem [shape: f32[3,1,128], index: 2, kind: input, shape index: {}]
  %s3 = inlined_call_operand.hbm [shape: f32[8,128], index: 3, kind: output, shape index: {}]
  %s4 = sld [smem:[#allocation0]]
  $region65: #{tpu_custom_call.1} parent=0
    _
  %s6 = ssub.s32 1, %s4
  %s7 = scalar_select 0, %s6, %s4
  $region1: #{tpu_custom_call.1} parent=0
    #allocation3 [shape = 'u8[4096]{0}', space=vmem, size = 0x1000, scoped, tag = 'input window, operand 0, single buffered']
    #allocation4 [shape = 's32[2]{0}', space=sflag, size = 0x8, scoped, tag = 'scoped memory for tpu_custom_call.1']
    #allocation5 [shape = 's32[2]{0}', space=sflag, size = 0x8, scoped, tag = 'scoped memory for tpu_custom_call.1']
    #allocation6 [shape = 'u8[131072]{0}', space=vmem, size = 0x20000, scoped, tag = 'input window, operand 1']
    #allocation7 [shape = 's32[2]{0}', space=sflag, size = 0x8, scoped, tag = 'scoped memory for tpu_custom_call.1']
    #allocation8 [shape = 'u8[4096]{0}', space=vmem, size = 0x1000, scoped, tag = 'output window, operand 0, single buffered']
    %8 = vsyncpa [#allocation4], 0
    %9 = vsyncpa [#allocation7], 0
    %s10 = scalar_lea.sflag [#allocation7], 1
    %11 = vsyncpa %s10, 0
    %12 = vsyncpa [#allocation5], 0
    loop: start=0, step=1, limit=5
    $region2: #{tpu_custom_call.1} parent=1 // loop_pre_header
      _
    $region3: #{tpu_custom_call.1} parent=1 // loop_header
      %s14 = sphi 0, %s18
      %p15 = scmp.ge.s32.totalorder %s14, 5
      %s21 = sphi 0, %s33
      %s22 = sphi 0, %s29
      %s23 = sphi 0, %s21
      %s24 = sphi 0, %s22
      %s25 = sphi 0, %s23
      %s26 = sphi 0, %s24
      %s36 = sphi 0, %s38
      %s39 = sphi 0, %s36
      %s40 = sphi 0, %s39
      %s56 = sphi 0, %s40
      %s62 = sphi 0, %s64
      %s65 = sphi 0, %s62
      %s66 = sphi 0, %s65
      %s82 = sphi 0, %s66
      %s88 = sphi 0, %s90
      %s91 = sphi 0, %s88
      %s92 = sphi 0, %s91
      %s108 = sphi 0, %s92
      %s114 = sphi 0, %s116
      %s117 = sphi 0, %s114
      %s118 = sphi 0, %s117
      %s134 = sphi 0, %s118
    $region4: #{tpu_custom_call.1} parent=1 // loop_header_branch
      %17 = sbr.rel (%p15) target = $region8
    $region5: #{tpu_custom_call.1} parent=1 // loop_body
      %s19 = ssub.s32 %s14, 1
      %s20 = ssub.s32 %s14, 2
      %s27 = sadd.s32 1, %s22
      %p28 = scmp.ge.s32.totalorder %s27, 3
      %s29 = scalar_select %p28, 0, %s27
      %s30 = sadd.s32 1, %s21
      %s31 = scalar_select %p28, %s30, %s21
      %p32 = scmp.ge.s32.totalorder %s31, 1
      %s33 = scalar_select %p32, 0, %s31
      %s34 = ssub.s32 %s21, %s33
      %p35 = scmp.eq.s32.totalorder %s34, 0
      %s37 = sadd.s32 %s36, 1
      %s38 = scalar_select %p35, %s36, %s37
      %p41 = pneg %p35
      %p42 = scmp.eq.s32.totalorder %s14, 2
      %p43 = por %p41, %p42
      %p44 = scmp.ne.s32.totalorder %s36, %s39
      %p45 = scmp.eq.s32.totalorder %s14, 0
      %p46 = por %p44, %p45
      %p47 = scmp.ne.s32.totalorder %s36, %s39
      %p48 = scmp.eq.s32.totalorder %s19, 2
      %p49 = por %p47, %p48
      %p50 = scmp.ne.s32.totalorder %s39, %s40
      %p51 = scmp.eq.s32.totalorder %s19, 0
      %p52 = por %p50, %p51
      %p53 = scmp.ne.s32.totalorder %s39, %s40
      %p54 = scmp.eq.s32.totalorder %s20, 2
      %p55 = por %p53, %p54
      %p57 = scmp.ne.s32.totalorder %s40, %s56
      %p58 = scmp.eq.s32.totalorder %s20, 0
      %p59 = por %p57, %p58
      %s60 = ssub.s32 %s22, %s29
      %p61 = scmp.eq.s32.totalorder %s60, 0
      %s63 = sadd.s32 %s62, 1
      %s64 = scalar_select %p61, %s62, %s63
      %p67 = pneg %p61
      %p68 = scmp.eq.s32.totalorder %s14, 2
      %p69 = por %p67, %p68
      %p70 = scmp.ne.s32.totalorder %s62, %s65
      %p71 = scmp.eq.s32.totalorder %s14, 0
      %p72 = por %p70, %p71
      %p73 = scmp.ne.s32.totalorder %s62, %s65
      %p74 = scmp.eq.s32.totalorder %s19, 2
      %p75 = por %p73, %p74
      %p76 = scmp.ne.s32.totalorder %s65, %s66
      %p77 = scmp.eq.s32.totalorder %s19, 0
      %p78 = por %p76, %p77
      %p79 = scmp.ne.s32.totalorder %s65, %s66
      %p80 = scmp.eq.s32.totalorder %s20, 2
      %p81 = por %p79, %p80
      %p83 = scmp.ne.s32.totalorder %s66, %s82
      %p84 = scmp.eq.s32.totalorder %s20, 0
      %p85 = por %p83, %p84
      %s86 = ssub.s32 %s22, %s29
      %p87 = scmp.eq.s32.totalorder %s86, 0
      %s89 = sadd.s32 %s88, 1
      %s90 = scalar_select %p87, %s88, %s89
      %p93 = pneg %p87
      %p94 = scmp.eq.s32.totalorder %s14, 2
      %p95 = por %p93, %p94
      %p96 = scmp.ne.s32.totalorder %s88, %s91
      %p97 = scmp.eq.s32.totalorder %s14, 0
      %p98 = por %p96, %p97
      %p99 = scmp.ne.s32.totalorder %s88, %s91
      %p100 = scmp.eq.s32.totalorder %s19, 2
      %p101 = por %p99, %p100
      %p102 = scmp.ne.s32.totalorder %s91, %s92
      %p103 = scmp.eq.s32.totalorder %s19, 0
      %p104 = por %p102, %p103
      %p105 = scmp.ne.s32.totalorder %s91, %s92
      %p106 = scmp.eq.s32.totalorder %s20, 2
      %p107 = por %p105, %p106
      %p109 = scmp.ne.s32.totalorder %s92, %s108
      %p110 = scmp.eq.s32.totalorder %s20, 0
      %p111 = por %p109, %p110
      %s112 = ssub.s32 %s21, %s33
      %p113 = scmp.eq.s32.totalorder %s112, 0
      %s115 = sadd.s32 %s114, 1
      %s116 = scalar_select %p113, %s114, %s115
      %p119 = pneg %p113
      %p120 = scmp.eq.s32.totalorder %s14, 2
      %p121 = por %p119, %p120
      %p122 = scmp.ne.s32.totalorder %s114, %s117
      %p123 = scmp.eq.s32.totalorder %s14, 0
      %p124 = por %p122, %p123
      %p125 = scmp.ne.s32.totalorder %s114, %s117
      %p126 = scmp.eq.s32.totalorder %s19, 2
      %p127 = por %p125, %p126
      %p128 = scmp.ne.s32.totalorder %s117, %s118
      %p129 = scmp.eq.s32.totalorder %s19, 0
      %p130 = por %p128, %p129
      %p131 = scmp.ne.s32.totalorder %s117, %s118
      %p132 = scmp.eq.s32.totalorder %s20, 2
      %p133 = por %p131, %p132
      %p135 = scmp.ne.s32.totalorder %s118, %s134
      %p136 = scmp.eq.s32.totalorder %s20, 0
      %p137 = por %p135, %p136
      %p138 = scmp.le.s32.totalorder 1, %s14
      %p139 = scmp.lt.s32.totalorder %s14, 4
      %p140 = pnand %p138, %p139
      %p141 = pneg %p140
      // Predicated region
      $region9: #{tpu_custom_call.1} parent=5 // pred_check
        _
      $region10: #{tpu_custom_call.1} parent=5 // pred_check_branch
        %143 = sbr.rel (%p140) target = $region12
      $region11: #{tpu_custom_call.1} parent=5 // pred_region
        %s144 = ssub.s32 %s14, 1
        // Predicated region
        $region13: #{tpu_custom_call.1} parent=11 // pred_check
          %p145 = pneg %p52
        $region14: #{tpu_custom_call.1} parent=11 // pred_check_branch
          %147 = sbr.rel (%p145) target = $region16
        $region15: #{tpu_custom_call.1} parent=11 // pred_region
          %s149 = ssub.s32 128, 128
          %150 = vsyncadd [#allocation4], %s149
          %s151 = smul.addr %s23, 128
          %s152 = scalar_lea.hbm %s0, %s151
          %s154 = sshll.u32 [#allocation3], 4
          %s155 = int_to_ptr.vmem [resolvable:$true] %s154
          %157 = dma.hbm_to_vmem [thread:$0]  %s152, 128, %s155, [#allocation4]
        $region16: #{tpu_custom_call.1} parent=11 // pred_fallthru
          _
      $region12: #{tpu_custom_call.1} parent=5 // pred_fallthru
        _
      %p158 = scmp.lt.s32.totalorder %s14, 3
      // Predicated region
      $region17: #{tpu_custom_call.1} parent=5 // pred_check
        %p159 = pneg %p158
      $region18: #{tpu_custom_call.1} parent=5 // pred_check_branch
        %161 = sbr.rel (%p159) target = $region20
      $region19: #{tpu_custom_call.1} parent=5 // pred_region
        // Predicated region
        $region21: #{tpu_custom_call.1} parent=19 // pred_check
          %p162 = pneg %p72
        $region22: #{tpu_custom_call.1} parent=19 // pred_check_branch
          %164 = sbr.rel (%p162) target = $region24
        $region23: #{tpu_custom_call.1} parent=19 // pred_region
          %s165 = sand.u32 %s62, 1
          %s166 = scalar_lea.sflag [#allocation7], %s165
          %s167 = sand.u32 %s62, 1
          %s168 = smul.addr %s167, 128
          %s169 = scalar_lea.vmem [#allocation6], %s168
          %s171 = ssub.s32 2048, 2048
          %172 = vsyncadd %s166, %s171
          %s173 = smul.addr %s22, 16
          %s174 = smul.addr %s173, 128
          %s175 = scalar_lea.hbm %s1, %s174
          %s176 = sshll.u32 %s169, 4
          %s177 = int_to_ptr.vmem [resolvable:$true] %s176
          %182 = dma.hbm_to_vmem [thread:$0]  %s175, 2048, %s177, %s166, 128, 128, 8
        $region24: #{tpu_custom_call.1} parent=19 // pred_fallthru
          _
        // Predicated region
        $region25: #{tpu_custom_call.1} parent=19 // pred_check
          %p183 = pneg %p98
        $region26: #{tpu_custom_call.1} parent=19 // pred_check_branch
          %185 = sbr.rel (%p183) target = $region28
        $region27: #{tpu_custom_call.1} parent=19 // pred_region
          %p186 = scmp.lt.s32.totalorder %s22, 2
          %s187 = scalar_select %p186, %s22, 2
          %s188 = scalar_lea.vmem %s2, %s187
        $region28: #{tpu_custom_call.1} parent=19 // pred_fallthru
          _
      $region20: #{tpu_custom_call.1} parent=5 // pred_fallthru
        _
      %p189 = scmp.le.s32.totalorder 1, %s14
      %p190 = scmp.lt.s32.totalorder %s14, 4
      %p191 = pnand %p189, %p190
      %p192 = pneg %p191
      // Predicated region
      $region29: #{tpu_custom_call.1} parent=5 // pred_check
        _
      $region30: #{tpu_custom_call.1} parent=5 // pred_check_branch
        %194 = sbr.rel (%p191) target = $region32
      $region31: #{tpu_custom_call.1} parent=5 // pred_region
        %s195 = ssub.s32 %s14, 1
        // Predicated region
        $region33: #{tpu_custom_call.1} parent=31 // pred_check
          %p196 = pneg %p52
        $region34: #{tpu_custom_call.1} parent=31 // pred_check_branch
          %198 = sbr.rel (%p196) target = $region36
        $region35: #{tpu_custom_call.1} parent=31 // pred_region
          %199 = dma.done [#allocation4], 128
        $region36: #{tpu_custom_call.1} parent=31 // pred_fallthru
          _
        %s200 = sand.u32 %s65, 1
        %s201 = scalar_lea.sflag [#allocation7], %s200
        %s202 = sand.u32 %s65, 1
        %s203 = smul.addr %s202, 128
        %s204 = scalar_lea.vmem [#allocation6], %s203
        // Predicated region
        $region37: #{tpu_custom_call.1} parent=31 // pred_check
          %p205 = pneg %p78
        $region38: #{tpu_custom_call.1} parent=31 // pred_check_branch
          %207 = sbr.rel (%p205) target = $region40
        $region39: #{tpu_custom_call.1} parent=31 // pred_region
          %208 = dma.done %s201, 2048
        $region40: #{tpu_custom_call.1} parent=31 // pred_fallthru
          _
        %p209 = pneg %p52
        %p210 = pneg %p49
        %s211 = sand.u32 %s65, 1
        %s212 = scalar_lea.sflag [#allocation7], %s211
        %s213 = sand.u32 %s65, 1
        %s214 = smul.addr %s213, 128
        %s215 = scalar_lea.vmem [#allocation6], %s214
        %p216 = pneg %p78
        %p217 = pneg %p75
        %p218 = scmp.lt.s32.totalorder %s24, 2
        %s219 = scalar_select %p218, %s24, 2
        %s220 = scalar_lea.vmem %s2, %s219
        %p221 = pneg %p104
        %p222 = pneg %p101
        %p223 = pneg %p130
        %p224 = pneg %p127
        %p225 = scmp.lt.s32.totalorder %s24, 2
        %s226 = scalar_select %p225, %s24, 2
        %s227 = scalar_lea.vmem %s2, %s226
        %p228 = scmp.eq.s32.totalorder %s24, 0
        // Predicated region
        $region41: #{tpu_custom_call.1} parent=31 // pred_check
          %p229 = pneg %p228
        $region42: #{tpu_custom_call.1} parent=31 // pred_check_branch
          %231 = sbr.rel (%p229) target = $region44
        $region43: #{tpu_custom_call.1} parent=31 // pred_region
          %v232 = vld [vmem:[#allocation3] sm:$0xff]
          %233 = vst [vmem:[#allocation2] sm:$0xff] %v232
        $region44: #{tpu_custom_call.1} parent=31 // pred_fallthru
          _
        %v234 = vld [vmem:[#allocation2] sm:$0xff]
        %v235 = vld [vmem:[%s204] sm:$0xff]
        %v236 = vld [vmem:[%s204 + $0x8] sm:$0xff]
        %v237 = vld [vmem:[%s204 + $0x10] sm:$0xff]
        %v238 = vld [vmem:[%s204 + $0x18] sm:$0xff]
        %v239 = vld [vmem:[%s204 + $0x20] sm:$0xff]
        %v240 = vld [vmem:[%s204 + $0x28] sm:$0xff]
        %v241 = vld [vmem:[%s204 + $0x30] sm:$0xff]
        %v242 = vld [vmem:[%s204 + $0x38] sm:$0xff]
        %v243 = vld [vmem:[%s204 + $0x40] sm:$0xff]
        %v244 = vld [vmem:[%s204 + $0x48] sm:$0xff]
        %v245 = vld [vmem:[%s204 + $0x50] sm:$0xff]
        %v246 = vld [vmem:[%s204 + $0x58] sm:$0xff]
        %v247 = vld [vmem:[%s204 + $0x60] sm:$0xff]
        %v248 = vld [vmem:[%s204 + $0x68] sm:$0xff]
        %v249 = vld [vmem:[%s204 + $0x70] sm:$0xff]
        %v250 = vld [vmem:[%s204 + $0x78] sm:$0xff]
        %v251 = vld [vmem:[%s227] sm:$0x1]
        %v253 = vlaneseq
        %v254 = vshrl.u32 %v253, 7
        %v255 = vsub.s32 0, %v254
        %v256 = vrot.slane %v251, %v255
        %258 = vmatprep.subr.mxu0 0.0
        %259 = vmatpush1.msra.mxu0 %v250
        %260 = vmatprep.subr.mxu0 0.0
        %261 = vmatpush1.msra.mxu0 %v249
        %262 = vmatprep.subr.mxu0 0.0
        %263 = vmatpush1.msra.mxu0 %v248
        %264 = vmatprep.subr.mxu0 0.0
        %265 = vmatpush1.msra.mxu0 %v247
        %266 = vmatprep.subr.mxu0 0.0
        %267 = vmatpush1.msra.mxu0 %v246
        %268 = vmatprep.subr.mxu0 0.0
        %269 = vmatpush1.msra.mxu0 %v245
        %270 = vmatprep.subr.mxu0 0.0
        %271 = vmatpush1.msra.mxu0 %v244
        %272 = vmatprep.subr.mxu0 0.0
        %273 = vmatpush1.msra.mxu0 %v243
        %274 = vmatprep.subr.mxu0 0.0
        %275 = vmatpush1.msra.mxu0 %v242
        %276 = vmatprep.subr.mxu0 0.0
        %277 = vmatpush1.msra.mxu0 %v241
        %278 = vmatprep.subr.mxu0 0.0
        %279 = vmatpush1.msra.mxu0 %v240
        %280 = vmatprep.subr.mxu0 0.0
        %281 = vmatpush1.msra.mxu0 %v239
        %282 = vmatprep.subr.mxu0 0.0
        %283 = vmatpush1.msra.mxu0 %v238
        %284 = vmatprep.subr.mxu0 0.0
        %285 = vmatpush1.msra.mxu0 %v237
        %286 = vmatprep.subr.mxu0 0.0
        %287 = vmatpush1.msra.mxu0 %v236
        %288 = vmatprep.subr.mxu0 0.0
        %289 = vmatpush1.msra.mxu0 %v235
        %290 = vmatprep.subr.mxu0 0.0
        %291 = vmatpush2.msra.mxu0 0.0
        %292 = vmatprep.subr.mxu0 0.0
        %293 = vmatpush2.msra.mxu0 0.0
        %294 = vmatprep.subr.mxu0 0.0
        %295 = vmatpush2.msra.mxu0 0.0
        %296 = vmatprep.subr.mxu0 0.0
        %297 = vmatpush2.msra.mxu0 0.0
        %298 = vmatprep.subr.mxu0 0.0
        %299 = vmatpush2.msra.mxu0 0.0
        %300 = vmatprep.subr.mxu0 0.0
        %301 = vmatpush2.msra.mxu0 0.0
        %302 = vmatprep.subr.mxu0 0.0
        %303 = vmatpush2.msra.mxu0 0.0
        %304 = vmatprep.subr.mxu0 0.0
        %305 = vmatpush2.msra.mxu0 0.0
        %306 = vmatprep.subr.mxu0 0.0
        %307 = vmatpush2.msra.mxu0 0.0
        %308 = vmatprep.subr.mxu0 0.0
        %309 = vmatpush2.msra.mxu0 0.0
        %310 = vmatprep.subr.mxu0 0.0
        %311 = vmatpush2.msra.mxu0 0.0
        %312 = vmatprep.subr.mxu0 0.0
        %313 = vmatpush2.msra.mxu0 0.0
        %314 = vmatprep.subr.mxu0 0.0
        %315 = vmatpush2.msra.mxu0 0.0
        %316 = vmatprep.subr.mxu0 0.0
        %317 = vmatpush2.msra.mxu0 0.0
        %318 = vmatprep.subr.mxu0 0.0
        %319 = vmatpush2.msra.mxu0 0.0
        %320 = vmatprep.subr.mxu0 0.0
        %321 = vmatpush2.msra.mxu0 0.0
        %322 = vmatprep.mubr.f32.mxu0 0.0
        %323 = vmatmul.mubr.f32.gmra.mxu0 %v234
        %v324 = vpop.f32.mrf.mxu0
        %v325 = vadd.f32 %v256, %v324
        %v326 = vpop.f32.mrf.mxu0
        %327 = vdwg.mxu0
        %p328 = scmp.lt.s32.totalorder %s24, 2
        // Predicated region
        $region45: #{tpu_custom_call.1} parent=31 // pred_check
          %p329 = pneg %p328
        $region46: #{tpu_custom_call.1} parent=31 // pred_check_branch
          %331 = sbr.rel (%p329) target = $region48
        $region47: #{tpu_custom_call.1} parent=31 // pred_region
          %v332 = vmax.f32 %v325, 0.0
          %333 = vst [vmem:[#allocation2] sm:$0xff] %v332
        $region48: #{tpu_custom_call.1} parent=31 // pred_fallthru
          _
        %p334 = scmp.eq.s32.totalorder %s24, 2
        // Predicated region
        $region49: #{tpu_custom_call.1} parent=31 // pred_check
          %p335 = pneg %p334
        $region50: #{tpu_custom_call.1} parent=31 // pred_check_branch
          %337 = sbr.rel (%p335) target = $region52
        $region51: #{tpu_custom_call.1} parent=31 // pred_region
          %338 = vst [vmem:[#allocation8] sm:$0xff] %v325
        $region52: #{tpu_custom_call.1} parent=31 // pred_fallthru
          _
        // Predicated region
        $region53: #{tpu_custom_call.1} parent=31 // pred_check
          %p339 = pneg %p127
        $region54: #{tpu_custom_call.1} parent=31 // pred_check_branch
          %341 = sbr.rel (%p339) target = $region56
        $region55: #{tpu_custom_call.1} parent=31 // pred_region
          %s343 = ssub.s32 128, 128
          %344 = vsyncadd [#allocation5], %s343
          %s345 = smul.addr %s23, 128
          %s346 = scalar_lea.hbm %s3, %s345
          %s348 = sshll.u32 [#allocation8], 4
          %s349 = int_to_ptr.vmem [resolvable:$true] %s348
          %351 = dma.vmem_to_hbm [thread:$0]  %s349, 128, %s346, [#allocation5]
        $region56: #{tpu_custom_call.1} parent=31 // pred_fallthru
          _
        // Predicated region
        $region57: #{tpu_custom_call.1} parent=31 // pred_check
          %p352 = pneg %p127
        $region58: #{tpu_custom_call.1} parent=31 // pred_check_branch
          %354 = sbr.rel (%p352) target = $region60
        $region59: #{tpu_custom_call.1} parent=31 // pred_region
          %355 = dma.done [#allocation5], 128
        $region60: #{tpu_custom_call.1} parent=31 // pred_fallthru
          _
      $region32: #{tpu_custom_call.1} parent=5 // pred_fallthru
        _
      %p356 = scmp.le.s32.totalorder 2, %s14
      // Predicated region
      $region61: #{tpu_custom_call.1} parent=5 // pred_check
        %p357 = pneg %p356
      $region62: #{tpu_custom_call.1} parent=5 // pred_check_branch
        %359 = sbr.rel (%p357) target = $region64
      $region63: #{tpu_custom_call.1} parent=5 // pred_region
        %s360 = ssub.s32 %s14, 2
      $region64: #{tpu_custom_call.1} parent=5 // pred_fallthru
        _
    $region6: #{tpu_custom_call.1} parent=1 // loop_footer
      %s18 = sadd.s32 1, %s14
    $region7: #{tpu_custom_call.1} parent=1 // loop_footer_branch
      %13 = sbr.rel target = $region3
    $region8: #{tpu_custom_call.1} parent=1 // loop_exit
      _
    %361 = vsyncpa [#allocation4], 1
    %s362 = scalar_lea.sflag [#allocation4], 1
    %363 = vsyncpa %s362, 1
    %364 = vsyncpa [#allocation7], 1
    %s365 = scalar_lea.sflag [#allocation7], 1
    %366 = vsyncpa %s365, 1
    %367 = vsyncpa [#allocation5], 1
    %s368 = scalar_lea.sflag [#allocation5], 1
    %369 = vsyncpa %s368, 1

</llo_original>
